<compile_context>
chip_gen: v5e
topology: v5e:2x2
jax: 0.10.0
libtpu: 0.0.40
codegen_flags: <defaults>
</compile_context>

<pallas_src>
import functools
import math

import jax
import jax.numpy as jnp
from jax import lax
from jax.experimental import pallas as pl
from jax.experimental.pallas import tpu as pltpu


def qkv_attention_kernel(qkv_ref, o_ref, *, n_heads, ch, scale, q_blk):
    """One batch element: all heads, all query chunks.

    qkv_ref: (1, H*3*C, T)  per-head [q; k; v] rows, seq on lanes
    o_ref  : (1, H*C, T)    per-head output rows, seq on lanes (lane-dense)
    """
    T = qkv_ref.shape[-1]
    n_q = T // q_blk
    s2 = scale * scale                      # softmax((q*s)^T(k*s)) == softmax(s^2 q^T k)

    for h in range(n_heads):                # unrolled: H known at trace time
        base = 3 * ch * h
        k = qkv_ref[0, base + ch:base + 2 * ch, :]        # (C, T)
        v = qkv_ref[0, base + 2 * ch:base + 3 * ch, :]    # (C, T)

        for j in range(n_q):                # query-axis tiling (lane chunks)
            lo = j * q_blk
            q = qkv_ref[0, base:base + ch, lo:lo + q_blk] * s2   # (C, q_blk)

            # wT[s, t] = sum_c k[c, s] * q[c, t]  — lhs-contracted form: only
            # the small (C, T) k gets transposed; the (T, q_blk) weight stays
            # in the orientation the second (native) MXU dot consumes.
            wt = lax.dot_general(k, q, (((0,), (0,)), ((), ())),
                                 preferred_element_type=jnp.float32)  # (T, q_blk)

            # softmax over the key axis (axis 0), in f32 as in the reference.
            wt = jnp.exp(wt - jnp.max(wt, axis=0, keepdims=True))
            ssum = jnp.sum(wt, axis=0, keepdims=True)                 # (1, q_blk)
            inv = pl.reciprocal(ssum, approx=True)                    # EUP slot
            inv = inv * (2.0 - ssum * inv)                            # Newton -> f32-exact
            wt = (wt * inv).astype(v.dtype)   # reference casts weights back to input dtype

            # a[c, t] = sum_s v[c, s] * wT[s, t]  — standard MXU matmul, no transposes.
            a = jnp.dot(v, wt, preferred_element_type=jnp.float32)    # (C, q_blk)

            o_ref[0, h * ch:(h + 1) * ch, lo:lo + q_blk] = a.astype(o_ref.dtype)


def qkv_attention_legacy(qkv, n_heads, n_frames=2,
                         use_cross_view_self_attn=False):
    """qkv: (N, n_heads*3*C, T)  ->  (N, n_heads*C, T)."""
    if use_cross_view_self_attn:
        # rearrange '(v b) n t -> b n (v t)'
        vb, width, t = qkv.shape
        b = vb // n_frames
        qkv = (qkv.reshape(n_frames, b, width, t)
                  .transpose(1, 2, 0, 3)
                  .reshape(b, width, n_frames * t))

    N, width, T = qkv.shape
    assert width % (3 * n_heads) == 0
    ch = width // (3 * n_heads)
    assert ch % 8 == 0, "per-head channel count must be sublane aligned"
    scale = 1.0 / math.sqrt(math.sqrt(ch))

    # Query-chunk width: keep the live (T, q_blk) f32 softmax block small and
    # the output stores lane-dense.  Non-multiple-of-128 T falls back to a
    # single (correct, but lane-sparse) chunk.
    q_blk = 128 if (T % 128 == 0) else T

    kernel = functools.partial(qkv_attention_kernel, n_heads=n_heads, ch=ch,
                               scale=scale, q_blk=q_blk)

    out = pl.pallas_call(
        kernel,
        out_shape=jax.ShapeDtypeStruct((N, n_heads * ch, T), qkv.dtype),
        grid_spec=pltpu.PrefetchScalarGridSpec(
            num_scalar_prefetch=0,
            grid=(N,),                       # heads handled inside the kernel
            in_specs=[
                pl.BlockSpec((1, width, T), lambda n: (n, 0, 0)),
            ],
            out_specs=pl.BlockSpec((1, n_heads * ch, T), lambda n: (n, 0, 0)),
        ),
        compiler_params=pltpu.CompilerParams(
            dimension_semantics=("parallel",)),
    )(qkv)

    if use_cross_view_self_attn:
        # rearrange 'b n (v t) -> (v b) n t'
        b, hc, vt = out.shape
        t = vt // n_frames
        out = (out.reshape(b, hc, n_frames, t)
                  .transpose(2, 0, 1, 3)
                  .reshape(n_frames * b, hc, t))
    return out


def ref_qkv_attention_legacy(qkv, n_heads, n_frames=2,
                             use_cross_view_self_attn=False):
    """Pure-JAX reference mirroring the PyTorch forward."""
    if use_cross_view_self_attn:
        vb, width, t = qkv.shape
        b = vb // n_frames
        qkv = (qkv.reshape(n_frames, b, width, t)
                  .transpose(1, 2, 0, 3)
                  .reshape(b, width, n_frames * t))

    bs, width, length = qkv.shape
    ch = width // (3 * n_heads)
    qkv_r = qkv.reshape(bs * n_heads, 3 * ch, length)
    q, k, v = qkv_r[:, :ch], qkv_r[:, ch:2 * ch], qkv_r[:, 2 * ch:]
    scale = 1.0 / math.sqrt(math.sqrt(ch))

    w = jnp.einsum('bct,bcs->bts', q * scale, k * scale,
                   precision=lax.Precision.HIGHEST)
    w = jax.nn.softmax(w.astype(jnp.float32), axis=-1).astype(qkv.dtype)
    a = jnp.einsum('bts,bcs->bct', w, v,
                   precision=lax.Precision.HIGHEST)
    a = a.reshape(bs, -1, length)

    if use_cross_view_self_attn:
        b2, hc, vt = a.shape
        t = vt // n_frames
        a = (a.reshape(b2, hc, n_frames, t)
              .transpose(2, 0, 1, 3)
              .reshape(n_frames * b2, hc, t))
    return a


if __name__ == "__main__":
    N = 2
    n_heads = 4
    ch = 32                      # per-head channels
    T = 128                      # sequence length (lane-dense)
    width = n_heads * 3 * ch     # 384

    key = jax.random.PRNGKey(0)
    k0, k1 = jax.random.split(key, 2)
    qkv = jax.random.normal(k0, (N, width, T), jnp.float32)

    # Default path (use_cross_view_self_attn=False).
    out = qkv_attention_legacy(qkv, n_heads)
    out = jax.block_until_ready(out)
    ref = ref_qkv_attention_legacy(qkv, n_heads)
    err = float(jnp.max(jnp.abs(out - ref)))
    assert out.shape == (N, n_heads * ch, T)
    assert jnp.allclose(out, ref, atol=2e-3, rtol=2e-3), f"max abs err = {err}"

    # Cross-view self-attention path (pure layout rearrange around the kernel).
    n_frames = 2
    qkv2 = jax.random.normal(k1, (n_frames * N, width, T), jnp.float32)
    out2 = qkv_attention_legacy(qkv2, n_heads, n_frames=n_frames,
                                use_cross_view_self_attn=True)
    out2 = jax.block_until_ready(out2)
    ref2 = ref_qkv_attention_legacy(qkv2, n_heads, n_frames=n_frames,
                                    use_cross_view_self_attn=True)
    err2 = float(jnp.max(jnp.abs(out2 - ref2)))
    assert out2.shape == (n_frames * N, n_heads * ch, T)
    assert jnp.allclose(out2, ref2, atol=2e-3, rtol=2e-3), \
        f"max abs err (cross-view) = {err2}"

    print("KERNEL_OK")
</pallas_src>

<mosaic_0001>
module attributes {stable_mosaic.version = 11 : i64} {
  func.func @qkv_attention_kernel(%arg0: i32, %arg1: memref<1x384x128xf32, #tpu.memory_space<vmem>>, %arg2: memref<1x128x128xf32, #tpu.memory_space<vmem>>) attributes {dimension_semantics = [#tpu.dimension_semantics<parallel>], iteration_bounds = array<i64: 2>, scalar_prefetch = 0 : i64, scratch_operands = 0 : i64, tpu.core_type = #tpu.core_type<tc>, window_params = [{transform_indices = @transform_0, window_bounds = array<i64: 1, 384, 128>}, {transform_indices = @transform_1, window_bounds = array<i64: 1, 128, 128>}]} {
    %c0 = arith.constant 0 : index
    %c32 = arith.constant 32 : index
    %c0_0 = arith.constant 0 : index
    %0 = vector.load %arg1[%c0, %c32, %c0_0] : memref<1x384x128xf32, #tpu.memory_space<vmem>>, vector<1x32x128xf32>
    %1 = vector.shape_cast %0 : vector<1x32x128xf32> to vector<32x128xf32>
    %c0_1 = arith.constant 0 : index
    %c64 = arith.constant 64 : index
    %c0_2 = arith.constant 0 : index
    %2 = vector.load %arg1[%c0_1, %c64, %c0_2] : memref<1x384x128xf32, #tpu.memory_space<vmem>>, vector<1x32x128xf32>
    %3 = vector.shape_cast %2 : vector<1x32x128xf32> to vector<32x128xf32>
    %c0_3 = arith.constant 0 : index
    %c0_4 = arith.constant 0 : index
    %c0_5 = arith.constant 0 : index
    %4 = vector.load %arg1[%c0_3, %c0_4, %c0_5] : memref<1x384x128xf32, #tpu.memory_space<vmem>>, vector<1x32x128xf32>
    %5 = vector.shape_cast %4 : vector<1x32x128xf32> to vector<32x128xf32>
    %cst = arith.constant 0.176776692 : f32
    %6 = vector.broadcast %cst : f32 to vector<32x128xf32>
    %7 = arith.mulf %5, %6 : vector<32x128xf32>
    %cst_6 = arith.constant dense<0.000000e+00> : vector<128x128xf32>
    %8 = tpu.matmul %1, %7, %cst_6 {dimension_numbers = #tpu.dot_dimension_numbers<[0], [0], [1], [1], [0, 1, 1, 1], [], []>} : vector<32x128xf32>, vector<32x128xf32>, vector<128x128xf32> -> vector<128x128xf32>
    %cst_7 = arith.constant dense<0xFF800000> : vector<128xf32>
    %9 = vector.multi_reduction <maximumf>, %8, %cst_7 [0] : vector<128x128xf32> to vector<128xf32>
    %10 = vector.shape_cast %9 : vector<128xf32> to vector<1x128xf32>
    %11 = vector.broadcast %10 : vector<1x128xf32> to vector<128x128xf32>
    %12 = arith.subf %8, %11 : vector<128x128xf32>
    %13 = math.exp %12 : vector<128x128xf32>
    %cst_8 = arith.constant dense<0.000000e+00> : vector<128xf32>
    %14 = vector.multi_reduction <add>, %13, %cst_8 [0] : vector<128x128xf32> to vector<128xf32>
    %15 = vector.shape_cast %14 : vector<128xf32> to vector<1x128xf32>
    %16 = tpu.reciprocal %15 {approx = true} : vector<1x128xf32> -> vector<1x128xf32>
    %17 = arith.mulf %15, %16 : vector<1x128xf32>
    %cst_9 = arith.constant 2.000000e+00 : f32
    %18 = vector.broadcast %cst_9 : f32 to vector<1x128xf32>
    %19 = arith.subf %18, %17 : vector<1x128xf32>
    %20 = arith.mulf %16, %19 : vector<1x128xf32>
    %21 = vector.broadcast %20 : vector<1x128xf32> to vector<128x128xf32>
    %22 = arith.mulf %13, %21 : vector<128x128xf32>
    %cst_10 = arith.constant dense<0.000000e+00> : vector<32x128xf32>
    %23 = tpu.matmul %3, %22, %cst_10 {dimension_numbers = #tpu.dot_dimension_numbers<[1], [0], [0], [1], [0, 0, 1, 1], [], []>} : vector<32x128xf32>, vector<128x128xf32>, vector<32x128xf32> -> vector<32x128xf32>
    %c0_11 = arith.constant 0 : index
    %c0_12 = arith.constant 0 : index
    %c0_13 = arith.constant 0 : index
    %24 = vector.load %arg2[%c0_11, %c0_12, %c0_13] : memref<1x128x128xf32, #tpu.memory_space<vmem>>, vector<1x32x128xf32>
    %25 = vector.shape_cast %24 : vector<1x32x128xf32> to vector<32x128xf32>
    %26 = vector.shape_cast %23 : vector<32x128xf32> to vector<1x32x128xf32>
    tpu.vector_store %arg2[%c0_11, %c0_12, %c0_13], %26 {strides = array<i32>} : memref<1x128x128xf32, #tpu.memory_space<vmem>>, vector<1x32x128xf32>,
    %c0_14 = arith.constant 0 : index
    %c128 = arith.constant 128 : index
    %c0_15 = arith.constant 0 : index
    %27 = vector.load %arg1[%c0_14, %c128, %c0_15] : memref<1x384x128xf32, #tpu.memory_space<vmem>>, vector<1x32x128xf32>
    %28 = vector.shape_cast %27 : vector<1x32x128xf32> to vector<32x128xf32>
    %c0_16 = arith.constant 0 : index
    %c160 = arith.constant 160 : index
    %c0_17 = arith.constant 0 : index
    %29 = vector.load %arg1[%c0_16, %c160, %c0_17] : memref<1x384x128xf32, #tpu.memory_space<vmem>>, vector<1x32x128xf32>
    %30 = vector.shape_cast %29 : vector<1x32x128xf32> to vector<32x128xf32>
    %c0_18 = arith.constant 0 : index
    %c96 = arith.constant 96 : index
    %c0_19 = arith.constant 0 : index
    %31 = vector.load %arg1[%c0_18, %c96, %c0_19] : memref<1x384x128xf32, #tpu.memory_space<vmem>>, vector<1x32x128xf32>
    %32 = vector.shape_cast %31 : vector<1x32x128xf32> to vector<32x128xf32>
    %cst_20 = arith.constant 0.176776692 : f32
    %33 = vector.broadcast %cst_20 : f32 to vector<32x128xf32>
    %34 = arith.mulf %32, %33 : vector<32x128xf32>
    %cst_21 = arith.constant dense<0.000000e+00> : vector<128x128xf32>
    %35 = tpu.matmul %28, %34, %cst_21 {dimension_numbers = #tpu.dot_dimension_numbers<[0], [0], [1], [1], [0, 1, 1, 1], [], []>} : vector<32x128xf32>, vector<32x128xf32>, vector<128x128xf32> -> vector<128x128xf32>
    %cst_22 = arith.constant dense<0xFF800000> : vector<128xf32>
    %36 = vector.multi_reduction <maximumf>, %35, %cst_22 [0] : vector<128x128xf32> to vector<128xf32>
    %37 = vector.shape_cast %36 : vector<128xf32> to vector<1x128xf32>
    %38 = vector.broadcast %37 : vector<1x128xf32> to vector<128x128xf32>
    %39 = arith.subf %35, %38 : vector<128x128xf32>
    %40 = math.exp %39 : vector<128x128xf32>
    %cst_23 = arith.constant dense<0.000000e+00> : vector<128xf32>
    %41 = vector.multi_reduction <add>, %40, %cst_23 [0] : vector<128x128xf32> to vector<128xf32>
    %42 = vector.shape_cast %41 : vector<128xf32> to vector<1x128xf32>
    %43 = tpu.reciprocal %42 {approx = true} : vector<1x128xf32> -> vector<1x128xf32>
    %44 = arith.mulf %42, %43 : vector<1x128xf32>
    %cst_24 = arith.constant 2.000000e+00 : f32
    %45 = vector.broadcast %cst_24 : f32 to vector<1x128xf32>
    %46 = arith.subf %45, %44 : vector<1x128xf32>
    %47 = arith.mulf %43, %46 : vector<1x128xf32>
    %48 = vector.broadcast %47 : vector<1x128xf32> to vector<128x128xf32>
    %49 = arith.mulf %40, %48 : vector<128x128xf32>
    %cst_25 = arith.constant dense<0.000000e+00> : vector<32x128xf32>
    %50 = tpu.matmul %30, %49, %cst_25 {dimension_numbers = #tpu.dot_dimension_numbers<[1], [0], [0], [1], [0, 0, 1, 1], [], []>} : vector<32x128xf32>, vector<128x128xf32>, vector<32x128xf32> -> vector<32x128xf32>
    %c0_26 = arith.constant 0 : index
    %c32_27 = arith.constant 32 : index
    %c0_28 = arith.constant 0 : index
    %51 = vector.load %arg2[%c0_26, %c32_27, %c0_28] : memref<1x128x128xf32, #tpu.memory_space<vmem>>, vector<1x32x128xf32>
    %52 = vector.shape_cast %51 : vector<1x32x128xf32> to vector<32x128xf32>
    %53 = vector.shape_cast %50 : vector<32x128xf32> to vector<1x32x128xf32>
    tpu.vector_store %arg2[%c0_26, %c32_27, %c0_28], %53 {strides = array<i32>} : memref<1x128x128xf32, #tpu.memory_space<vmem>>, vector<1x32x128xf32>,
    %c0_29 = arith.constant 0 : index
    %c224 = arith.constant 224 : index
    %c0_30 = arith.constant 0 : index
    %54 = vector.load %arg1[%c0_29, %c224, %c0_30] : memref<1x384x128xf32, #tpu.memory_space<vmem>>, vector<1x32x128xf32>
    %55 = vector.shape_cast %54 : vector<1x32x128xf32> to vector<32x128xf32>
    %c0_31 = arith.constant 0 : index
    %c256 = arith.constant 256 : index
    %c0_32 = arith.constant 0 : index
    %56 = vector.load %arg1[%c0_31, %c256, %c0_32] : memref<1x384x128xf32, #tpu.memory_space<vmem>>, vector<1x32x128xf32>
    %57 = vector.shape_cast %56 : vector<1x32x128xf32> to vector<32x128xf32>
    %c0_33 = arith.constant 0 : index
    %c192 = arith.constant 192 : index
    %c0_34 = arith.constant 0 : index
    %58 = vector.load %arg1[%c0_33, %c192, %c0_34] : memref<1x384x128xf32, #tpu.memory_space<vmem>>, vector<1x32x128xf32>
    %59 = vector.shape_cast %58 : vector<1x32x128xf32> to vector<32x128xf32>
    %cst_35 = arith.constant 0.176776692 : f32
    %60 = vector.broadcast %cst_35 : f32 to vector<32x128xf32>
    %61 = arith.mulf %59, %60 : vector<32x128xf32>
    %cst_36 = arith.constant dense<0.000000e+00> : vector<128x128xf32>
    %62 = tpu.matmul %55, %61, %cst_36 {dimension_numbers = #tpu.dot_dimension_numbers<[0], [0], [1], [1], [0, 1, 1, 1], [], []>} : vector<32x128xf32>, vector<32x128xf32>, vector<128x128xf32> -> vector<128x128xf32>
    %cst_37 = arith.constant dense<0xFF800000> : vector<128xf32>
    %63 = vector.multi_reduction <maximumf>, %62, %cst_37 [0] : vector<128x128xf32> to vector<128xf32>
    %64 = vector.shape_cast %63 : vector<128xf32> to vector<1x128xf32>
    %65 = vector.broadcast %64 : vector<1x128xf32> to vector<128x128xf32>
    %66 = arith.subf %62, %65 : vector<128x128xf32>
    %67 = math.exp %66 : vector<128x128xf32>
    %cst_38 = arith.constant dense<0.000000e+00> : vector<128xf32>
    %68 = vector.multi_reduction <add>, %67, %cst_38 [0] : vector<128x128xf32> to vector<128xf32>
    %69 = vector.shape_cast %68 : vector<128xf32> to vector<1x128xf32>
    %70 = tpu.reciprocal %69 {approx = true} : vector<1x128xf32> -> vector<1x128xf32>
    %71 = arith.mulf %69, %70 : vector<1x128xf32>
    %cst_39 = arith.constant 2.000000e+00 : f32
    %72 = vector.broadcast %cst_39 : f32 to vector<1x128xf32>
    %73 = arith.subf %72, %71 : vector<1x128xf32>
    %74 = arith.mulf %70, %73 : vector<1x128xf32>
    %75 = vector.broadcast %74 : vector<1x128xf32> to vector<128x128xf32>
    %76 = arith.mulf %67, %75 : vector<128x128xf32>
    %cst_40 = arith.constant dense<0.000000e+00> : vector<32x128xf32>
    %77 = tpu.matmul %57, %76, %cst_40 {dimension_numbers = #tpu.dot_dimension_numbers<[1], [0], [0], [1], [0, 0, 1, 1], [], []>} : vector<32x128xf32>, vector<128x128xf32>, vector<32x128xf32> -> vector<32x128xf32>
    %c0_41 = arith.constant 0 : index
    %c64_42 = arith.constant 64 : index
    %c0_43 = arith.constant 0 : index
    %78 = vector.load %arg2[%c0_41, %c64_42, %c0_43] : memref<1x128x128xf32, #tpu.memory_space<vmem>>, vector<1x32x128xf32>
    %79 = vector.shape_cast %78 : vector<1x32x128xf32> to vector<32x128xf32>
    %80 = vector.shape_cast %77 : vector<32x128xf32> to vector<1x32x128xf32>
    tpu.vector_store %arg2[%c0_41, %c64_42, %c0_43], %80 {strides = array<i32>} : memref<1x128x128xf32, #tpu.memory_space<vmem>>, vector<1x32x128xf32>,
    %c0_44 = arith.constant 0 : index
    %c320 = arith.constant 320 : index
    %c0_45 = arith.constant 0 : index
    %81 = vector.load %arg1[%c0_44, %c320, %c0_45] : memref<1x384x128xf32, #tpu.memory_space<vmem>>, vector<1x32x128xf32>
    %82 = vector.shape_cast %81 : vector<1x32x128xf32> to vector<32x128xf32>
    %c0_46 = arith.constant 0 : index
    %c352 = arith.constant 352 : index
    %c0_47 = arith.constant 0 : index
    %83 = vector.load %arg1[%c0_46, %c352, %c0_47] : memref<1x384x128xf32, #tpu.memory_space<vmem>>, vector<1x32x128xf32>
    %84 = vector.shape_cast %83 : vector<1x32x128xf32> to vector<32x128xf32>
    %c0_48 = arith.constant 0 : index
    %c288 = arith.constant 288 : index
    %c0_49 = arith.constant 0 : index
    %85 = vector.load %arg1[%c0_48, %c288, %c0_49] : memref<1x384x128xf32, #tpu.memory_space<vmem>>, vector<1x32x128xf32>
    %86 = vector.shape_cast %85 : vector<1x32x128xf32> to vector<32x128xf32>
    %cst_50 = arith.constant 0.176776692 : f32
    %87 = vector.broadcast %cst_50 : f32 to vector<32x128xf32>
    %88 = arith.mulf %86, %87 : vector<32x128xf32>
    %cst_51 = arith.constant dense<0.000000e+00> : vector<128x128xf32>
    %89 = tpu.matmul %82, %88, %cst_51 {dimension_numbers = #tpu.dot_dimension_numbers<[0], [0], [1], [1], [0, 1, 1, 1], [], []>} : vector<32x128xf32>, vector<32x128xf32>, vector<128x128xf32> -> vector<128x128xf32>
    %cst_52 = arith.constant dense<0xFF800000> : vector<128xf32>
    %90 = vector.multi_reduction <maximumf>, %89, %cst_52 [0] : vector<128x128xf32> to vector<128xf32>
    %91 = vector.shape_cast %90 : vector<128xf32> to vector<1x128xf32>
    %92 = vector.broadcast %91 : vector<1x128xf32> to vector<128x128xf32>
    %93 = arith.subf %89, %92 : vector<128x128xf32>
    %94 = math.exp %93 : vector<128x128xf32>
    %cst_53 = arith.constant dense<0.000000e+00> : vector<128xf32>
    %95 = vector.multi_reduction <add>, %94, %cst_53 [0] : vector<128x128xf32> to vector<128xf32>
    %96 = vector.shape_cast %95 : vector<128xf32> to vector<1x128xf32>
    %97 = tpu.reciprocal %96 {approx = true} : vector<1x128xf32> -> vector<1x128xf32>
    %98 = arith.mulf %96, %97 : vector<1x128xf32>
    %cst_54 = arith.constant 2.000000e+00 : f32
    %99 = vector.broadcast %cst_54 : f32 to vector<1x128xf32>
    %100 = arith.subf %99, %98 : vector<1x128xf32>
    %101 = arith.mulf %97, %100 : vector<1x128xf32>
    %102 = vector.broadcast %101 : vector<1x128xf32> to vector<128x128xf32>
    %103 = arith.mulf %94, %102 : vector<128x128xf32>
    %cst_55 = arith.constant dense<0.000000e+00> : vector<32x128xf32>
    %104 = tpu.matmul %84, %103, %cst_55 {dimension_numbers = #tpu.dot_dimension_numbers<[1], [0], [0], [1], [0, 0, 1, 1], [], []>} : vector<32x128xf32>, vector<128x128xf32>, vector<32x128xf32> -> vector<32x128xf32>
    %c0_56 = arith.constant 0 : index
    %c96_57 = arith.constant 96 : index
    %c0_58 = arith.constant 0 : index
    %105 = vector.load %arg2[%c0_56, %c96_57, %c0_58] : memref<1x128x128xf32, #tpu.memory_space<vmem>>, vector<1x32x128xf32>
    %106 = vector.shape_cast %105 : vector<1x32x128xf32> to vector<32x128xf32>
    %107 = vector.shape_cast %104 : vector<32x128xf32> to vector<1x32x128xf32>
    tpu.vector_store %arg2[%c0_56, %c96_57, %c0_58], %107 {strides = array<i32>} : memref<1x128x128xf32, #tpu.memory_space<vmem>>, vector<1x32x128xf32>,
    return
  }
  func.func @transform_0(%arg0: i32) -> (i32, i32, i32) {
    %c0_i32 = arith.constant 0 : i32
    %c0_i32_0 = arith.constant 0 : i32
    %c0_i32_1 = arith.constant 0 : i32
    return %arg0, %c0_i32, %c0_i32_0 : i32, i32, i32
  }
  func.func @transform_1(%arg0: i32) -> (i32, i32, i32) {
    %c0_i32 = arith.constant 0 : i32
    %c0_i32_0 = arith.constant 0 : i32
    %c0_i32_1 = arith.constant 0 : i32
    return %arg0, %c0_i32, %c0_i32_0 : i32, i32, i32
  }
}

</mosaic_0001>

<llo_original>
// kernel: tpu_custom_call.1
$region0: #{tpu_custom_call.1}
  #allocation0 [shape = 'u32[]', space=smem, size = 0x4, offset = 0x4, fixed_abs, tag = 'smem constant byte address 0x4 - core index']
  #allocation1 [shape = 'u32[72,128]{1,0:T(1,128)}', space=vmem, size = 0x9000, scoped, tag = 'internal scratch']
  %s0 = inlined_call_operand.hbm [shape: f32[2,384,128], index: 0, kind: input, shape index: {}]
  %s1 = inlined_call_operand.hbm [shape: f32[2,128,128], index: 1, kind: output, shape index: {}]
  %s2 = sld [smem:[#allocation0]]
  $region41: #{tpu_custom_call.1} parent=0
    _
  %s4 = ssub.s32 1, %s2
  %s5 = scalar_select 0, %s4, %s2
  $region1: #{tpu_custom_call.1} parent=0
    #allocation2 [shape = 'u8[393216]{0}', space=vmem, size = 0x60000, scoped, tag = 'input window, operand 0']
    #allocation3 [shape = 's32[2]{0}', space=sflag, size = 0x8, scoped, tag = 'scoped memory for tpu_custom_call.1']
    #allocation4 [shape = 's32[2]{0}', space=sflag, size = 0x8, scoped, tag = 'scoped memory for tpu_custom_call.1']
    #allocation5 [shape = 'u8[131072]{0}', space=vmem, size = 0x20000, scoped, tag = 'output window, operand 0']
    %6 = vsyncpa [#allocation3], 0
    %s7 = scalar_lea.sflag [#allocation3], 1
    %8 = vsyncpa %s7, 0
    %9 = vsyncpa [#allocation4], 0
    %s10 = scalar_lea.sflag [#allocation4], 1
    %11 = vsyncpa %s10, 0
    loop: start=0, step=1, limit=4
    $region2: #{tpu_custom_call.1} parent=1 // loop_pre_header
      _
    $region3: #{tpu_custom_call.1} parent=1 // loop_header
      %s13 = sphi 0, %s17
      %p14 = scmp.ge.s32.totalorder %s13, 4
      %s23 = sphi 0, %s25
      %s26 = sphi 0, %s23
      %s27 = sphi 0, %s26
      %s43 = sphi 0, %s27
      %s49 = sphi 0, %s51
      %s52 = sphi 0, %s49
      %s53 = sphi 0, %s52
      %s69 = sphi 0, %s53
    $region4: #{tpu_custom_call.1} parent=1 // loop_header_branch
      %16 = sbr.rel (%p14) target = $region8
    $region5: #{tpu_custom_call.1} parent=1 // loop_body
      %s18 = ssub.s32 %s13, 1
      %s19 = ssub.s32 %s13, 2
      %s20 = sadd.s32 %s13, 1
      %s21 = ssub.s32 %s13, %s20
      %p22 = scmp.eq.s32.totalorder %s21, 0
      %s24 = sadd.s32 %s23, 1
      %s25 = scalar_select %p22, %s23, %s24
      %p28 = pneg %p22
      %p29 = scmp.eq.s32.totalorder %s13, 1
      %p30 = por %p28, %p29
      %p31 = scmp.ne.s32.totalorder %s23, %s26
      %p32 = scmp.eq.s32.totalorder %s13, 0
      %p33 = por %p31, %p32
      %p34 = scmp.ne.s32.totalorder %s23, %s26
      %p35 = scmp.eq.s32.totalorder %s18, 1
      %p36 = por %p34, %p35
      %p37 = scmp.ne.s32.totalorder %s26, %s27
      %p38 = scmp.eq.s32.totalorder %s18, 0
      %p39 = por %p37, %p38
      %p40 = scmp.ne.s32.totalorder %s26, %s27
      %p41 = scmp.eq.s32.totalorder %s19, 1
      %p42 = por %p40, %p41
      %p44 = scmp.ne.s32.totalorder %s27, %s43
      %p45 = scmp.eq.s32.totalorder %s19, 0
      %p46 = por %p44, %p45
      %s47 = ssub.s32 %s13, %s20
      %p48 = scmp.eq.s32.totalorder %s47, 0
      %s50 = sadd.s32 %s49, 1
      %s51 = scalar_select %p48, %s49, %s50
      %p54 = pneg %p48
      %p55 = scmp.eq.s32.totalorder %s13, 1
      %p56 = por %p54, %p55
      %p57 = scmp.ne.s32.totalorder %s49, %s52
      %p58 = scmp.eq.s32.totalorder %s13, 0
      %p59 = por %p57, %p58
      %p60 = scmp.ne.s32.totalorder %s49, %s52
      %p61 = scmp.eq.s32.totalorder %s18, 1
      %p62 = por %p60, %p61
      %p63 = scmp.ne.s32.totalorder %s52, %s53
      %p64 = scmp.eq.s32.totalorder %s18, 0
      %p65 = por %p63, %p64
      %p66 = scmp.ne.s32.totalorder %s52, %s53
      %p67 = scmp.eq.s32.totalorder %s19, 1
      %p68 = por %p66, %p67
      %p70 = scmp.ne.s32.totalorder %s53, %s69
      %p71 = scmp.eq.s32.totalorder %s19, 0
      %p72 = por %p70, %p71
      %p73 = scmp.le.s32.totalorder 1, %s13
      %p74 = scmp.lt.s32.totalorder %s13, 3
      %p75 = pnand %p73, %p74
      %p76 = pneg %p75
      // Predicated region
      $region9: #{tpu_custom_call.1} parent=5 // pred_check
        _
      $region10: #{tpu_custom_call.1} parent=5 // pred_check_branch
        %78 = sbr.rel (%p75) target = $region12
      $region11: #{tpu_custom_call.1} parent=5 // pred_region
        %s79 = ssub.s32 %s13, 1
      $region12: #{tpu_custom_call.1} parent=5 // pred_fallthru
        _
      %p80 = scmp.lt.s32.totalorder %s13, 2
      // Predicated region
      $region13: #{tpu_custom_call.1} parent=5 // pred_check
        %p81 = pneg %p80
      $region14: #{tpu_custom_call.1} parent=5 // pred_check_branch
        %83 = sbr.rel (%p81) target = $region16
      $region15: #{tpu_custom_call.1} parent=5 // pred_region
        // Predicated region
        $region17: #{tpu_custom_call.1} parent=15 // pred_check
          %p84 = pneg %p33
        $region18: #{tpu_custom_call.1} parent=15 // pred_check_branch
          %86 = sbr.rel (%p84) target = $region20
        $region19: #{tpu_custom_call.1} parent=15 // pred_region
          %s87 = sand.u32 %s23, 1
          %s88 = scalar_lea.sflag [#allocation3], %s87
          %s89 = sand.u32 %s23, 1
          %s90 = smul.addr %s89, 384
          %s91 = scalar_lea.vmem [#allocation2], %s90
          %93 = vsyncadd %s88, 0
          %s94 = smul.addr %s13, 48
          %s95 = smul.addr %s94, 8
          %s96 = scalar_lea.hbm %s0, %s95
          %s97 = sshll.u32 %s96, 4
          %s98 = int_to_ptr.hbm [resolvable:$true] %s97
          %s99 = sshll.u32 %s91, 4
          %s100 = int_to_ptr.vmem [resolvable:$true] %s99
          %105 = dma.hbm_to_vmem [thread:$0]  %s98, 6144, %s100, %s88, 128, 128, 8
        $region20: #{tpu_custom_call.1} parent=15 // pred_fallthru
          _
      $region16: #{tpu_custom_call.1} parent=5 // pred_fallthru
        _
      %p106 = scmp.le.s32.totalorder 1, %s13
      %p107 = scmp.lt.s32.totalorder %s13, 3
      %p108 = pnand %p106, %p107
      %p109 = pneg %p108
      // Predicated region
      $region21: #{tpu_custom_call.1} parent=5 // pred_check
        _
      $region22: #{tpu_custom_call.1} parent=5 // pred_check_branch
        %111 = sbr.rel (%p108) target = $region24
      $region23: #{tpu_custom_call.1} parent=5 // pred_region
        %s112 = ssub.s32 %s13, 1
        %s113 = sand.u32 %s26, 1
        %s114 = scalar_lea.sflag [#allocation3], %s113
        %s115 = sand.u32 %s26, 1
        %s116 = smul.addr %s115, 384
        %s117 = scalar_lea.vmem [#allocation2], %s116
        // Predicated region
        $region25: #{tpu_custom_call.1} parent=23 // pred_check
          %p118 = pneg %p39
        $region26: #{tpu_custom_call.1} parent=23 // pred_check_branch
          %120 = sbr.rel (%p118) target = $region28
        $region27: #{tpu_custom_call.1} parent=23 // pred_region
          %122 = dma.done %s114, 6144
        $region28: #{tpu_custom_call.1} parent=23 // pred_fallthru
          _
        %s123 = sand.u32 %s26, 1
        %s124 = scalar_lea.sflag [#allocation3], %s123
        %s125 = sand.u32 %s26, 1
        %s126 = smul.addr %s125, 384
        %s127 = scalar_lea.vmem [#allocation2], %s126
        %p128 = pneg %p39
        %p129 = pneg %p36
        %p130 = pneg %p65
        %p131 = pneg %p62
        %s132 = sand.u32 %s52, 1
        %s133 = scalar_lea.sflag [#allocation4], %s132
        %s134 = sand.u32 %s52, 1
        %s135 = smul.addr %s134, 128
        %s136 = scalar_lea.vmem [#allocation5], %s135
        %v137 = vld [vmem:[%s117 + $0x20] sm:$0xff]
        %v138 = vld [vmem:[%s117 + $0x28] sm:$0xff]
        %v139 = vld [vmem:[%s117 + $0x30] sm:$0xff]
        %v140 = vld [vmem:[%s117 + $0x38] sm:$0xff]
        %v141 = vld [vmem:[%s117 + $0x40] sm:$0xff]
        %v142 = vld [vmem:[%s117 + $0x48] sm:$0xff]
        %v143 = vld [vmem:[%s117 + $0x50] sm:$0xff]
        %v144 = vld [vmem:[%s117 + $0x58] sm:$0xff]
        %v145 = vld [vmem:[%s117] sm:$0xff]
        %v146 = vld [vmem:[%s117 + $0x8] sm:$0xff]
        %v147 = vld [vmem:[%s117 + $0x10] sm:$0xff]
        %v148 = vld [vmem:[%s117 + $0x18] sm:$0xff]
        %v149 = vmul.f32 %v145, 0.17677669
        %v150 = vmul.f32 %v146, 0.17677669
        %v151 = vmul.f32 %v147, 0.17677669
        %v152 = vmul.f32 %v148, 0.17677669
        %153 = vxpose.xlu0.b32.start [1/16] %v137, 128
        %154 = vxpose.xlu0.b32.cont [2/16] %v138, 128
        %155 = vxpose.xlu0.b32.cont [3/16] %v139, 128
        %156 = vxpose.xlu0.b32.cont [4/16] %v140, 128
        %157 = vxpose.xlu0.b32.cont [5/16] 0.0, 128
        %158 = vxpose.xlu0.b32.cont [6/16] 0.0, 128
        %159 = vxpose.xlu0.b32.cont [7/16] 0.0, 128
        %160 = vxpose.xlu0.b32.cont [8/16] 0.0, 128
        %161 = vxpose.xlu0.b32.cont [9/16] 0.0, 128
        %162 = vxpose.xlu0.b32.cont [10/16] 0.0, 128
        %163 = vxpose.xlu0.b32.cont [11/16] 0.0, 128
        %164 = vxpose.xlu0.b32.cont [12/16] 0.0, 128
        %165 = vxpose.xlu0.b32.cont [13/16] 0.0, 128
        %166 = vxpose.xlu0.b32.cont [14/16] 0.0, 128
        %167 = vxpose.xlu0.b32.cont [15/16] 0.0, 128
        %168 = vxpose.xlu0.b32.end [16/16] 0.0, 128
        %v169 = vpop.trf.xlu0
        %v170 = vpop.trf.xlu0
        %v171 = vpop.trf.xlu0
        %v172 = vpop.trf.xlu0
        %v173 = vpop.trf.xlu0
        %v174 = vpop.trf.xlu0
        %v175 = vpop.trf.xlu0
        %v176 = vpop.trf.xlu0
        %v177 = vpop.trf.xlu0
        %v178 = vpop.trf.xlu0
        %v179 = vpop.trf.xlu0
        %v180 = vpop.trf.xlu0
        %v181 = vpop.trf.xlu0
        %v182 = vpop.trf.xlu0
        %v183 = vpop.trf.xlu0
        %v184 = vpop.trf.xlu0
        %vm185 = vcmask 261120
        %v187 = vsel %vm185, %v169, 0
        %v190 = vsel %vm185, %v170, 0
        %v193 = vsel %vm185, %v171, 0
        %v196 = vsel %vm185, %v172, 0
        %v199 = vsel %vm185, %v173, 0
        %v202 = vsel %vm185, %v174, 0
        %v205 = vsel %vm185, %v175, 0
        %v208 = vsel %vm185, %v176, 0
        %v211 = vsel %vm185, %v177, 0
        %v214 = vsel %vm185, %v178, 0
        %v217 = vsel %vm185, %v179, 0
        %v220 = vsel %vm185, %v180, 0
        %v223 = vsel %vm185, %v181, 0
        %v226 = vsel %vm185, %v182, 0
        %v229 = vsel %vm185, %v183, 0
        %v232 = vsel %vm185, %v184, 0
        %234 = vmatpush.msra.mxu0 0.0
        %235 = vmatpush.msra.mxu0 0.0
        %236 = vmatpush.msra.mxu0 0.0
        %237 = vmatpush.msra.mxu0 0.0
        %238 = vmatpush.msra.mxu0 0.0
        %239 = vmatpush.msra.mxu0 0.0
        %240 = vmatpush.msra.mxu0 0.0
        %241 = vmatpush.msra.mxu0 0.0
        %242 = vmatpush.msra.mxu0 0.0
        %243 = vmatpush.msra.mxu0 0.0
        %244 = vmatpush.msra.mxu0 0.0
        %245 = vmatpush.msra.mxu0 0.0
        %246 = vmatpush.msra.mxu0 %v152
        %247 = vmatpush.msra.mxu0 %v151
        %248 = vmatpush.msra.mxu0 %v150
        %249 = vmatpush.msra.mxu0 %v149
        %250 = vmatmul.f32.gmra.mxu0 %v187
        %v251 = vpop.f32.mrf.mxu0
        %v252 = vadd.f32 0.0, %v251
        %253 = vmatmul.f32.gmra.mxu0 %v190
        %v254 = vpop.f32.mrf.mxu0
        %v255 = vadd.f32 0.0, %v254
        %256 = vmatmul.f32.gmra.mxu0 %v193
        %v257 = vpop.f32.mrf.mxu0
        %v258 = vadd.f32 0.0, %v257
        %259 = vmatmul.f32.gmra.mxu0 %v196
        %v260 = vpop.f32.mrf.mxu0
        %v261 = vadd.f32 0.0, %v260
        %262 = vmatmul.f32.gmra.mxu0 %v199
        %v263 = vpop.f32.mrf.mxu0
        %v264 = vadd.f32 0.0, %v263
        %265 = vmatmul.f32.gmra.mxu0 %v202
        %v266 = vpop.f32.mrf.mxu0
        %v267 = vadd.f32 0.0, %v266
        %268 = vmatmul.f32.gmra.mxu0 %v205
        %v269 = vpop.f32.mrf.mxu0
        %v270 = vadd.f32 0.0, %v269
        %271 = vmatmul.f32.gmra.mxu0 %v208
        %v272 = vpop.f32.mrf.mxu0
        %v273 = vadd.f32 0.0, %v272
        %274 = vmatmul.f32.gmra.mxu0 %v211
        %v275 = vpop.f32.mrf.mxu0
        %v276 = vadd.f32 0.0, %v275
        %277 = vmatmul.f32.gmra.mxu0 %v214
        %v278 = vpop.f32.mrf.mxu0
        %v279 = vadd.f32 0.0, %v278
        %280 = vmatmul.f32.gmra.mxu0 %v217
        %v281 = vpop.f32.mrf.mxu0
        %v282 = vadd.f32 0.0, %v281
        %283 = vmatmul.f32.gmra.mxu0 %v220
        %v284 = vpop.f32.mrf.mxu0
        %v285 = vadd.f32 0.0, %v284
        %286 = vmatmul.f32.gmra.mxu0 %v223
        %v287 = vpop.f32.mrf.mxu0
        %v288 = vadd.f32 0.0, %v287
        %289 = vmatmul.f32.gmra.mxu0 %v226
        %v290 = vpop.f32.mrf.mxu0
        %v291 = vadd.f32 0.0, %v290
        %292 = vmatmul.f32.gmra.mxu0 %v229
        %v293 = vpop.f32.mrf.mxu0
        %v294 = vadd.f32 0.0, %v293
        %295 = vmatmul.f32.gmra.mxu0 %v232
        %v296 = vpop.f32.mrf.mxu0
        %v297 = vadd.f32 0.0, %v296
        %298 = vdwg.mxu0
        %v299 = vmax.f32 %v252, %v264
        %v300 = vmax.f32 %v255, %v267
        %v301 = vmax.f32 %v258, %v270
        %v302 = vmax.f32 %v261, %v273
        %v303 = vmax.f32 %v299, %v276
        %v304 = vmax.f32 %v300, %v279
        %v305 = vmax.f32 %v301, %v282
        %v306 = vmax.f32 %v302, %v285
        %v307 = vmax.f32 %v303, %v288
        %v308 = vmax.f32 %v304, %v291
        %v309 = vmax.f32 %v305, %v294
        %v310 = vmax.f32 %v306, %v297
        %v311 = vmax.f32 %v307, %v308
        %v312 = vmax.f32 %v309, %v310
        %v313 = vmax.f32 %v311, %v312
        %v314 = vrot.slane %v313, 4
        %v315 = vmax.f32 %v313, %v314
        %v316 = vrot.slane %v315, 2
        %v317 = vmax.f32 %v315, %v316
        %v318 = vrot.slane %v317, 1
        %v319 = vmax.f32 %v317, %v318
        %v320 = vsub.f32 %v252, %v319
        %v321 = vsub.f32 %v255, %v319
        %v322 = vsub.f32 %v258, %v319
        %v323 = vsub.f32 %v261, %v319
        %v324 = vsub.f32 %v264, %v319
        %v325 = vsub.f32 %v267, %v319
        %v326 = vsub.f32 %v270, %v319
        %v327 = vsub.f32 %v273, %v319
        %v328 = vsub.f32 %v276, %v319
        %v329 = vsub.f32 %v279, %v319
        %v330 = vsub.f32 %v282, %v319
        %v331 = vsub.f32 %v285, %v319
        %v332 = vsub.f32 %v288, %v319
        %v333 = vsub.f32 %v291, %v319
        %v334 = vsub.f32 %v294, %v319
        %v335 = vsub.f32 %v297, %v319
        %v336 = vmul.f32 %v320, 1.442695
        %v337 = vpow.pop %v336
        %v338 = vmul.f32 %v321, 1.442695
        %v339 = vpow.pop %v338
        %v340 = vmul.f32 %v322, 1.442695
        %v341 = vpow.pop %v340
        %v342 = vmul.f32 %v323, 1.442695
        %v343 = vpow.pop %v342
        %v344 = vmul.f32 %v324, 1.442695
        %v345 = vpow.pop %v344
        %v346 = vmul.f32 %v325, 1.442695
        %v347 = vpow.pop %v346
        %v348 = vmul.f32 %v326, 1.442695
        %v349 = vpow.pop %v348
        %v350 = vmul.f32 %v327, 1.442695
        %v351 = vpow.pop %v350
        %v352 = vmul.f32 %v328, 1.442695
        %v353 = vpow.pop %v352
        %v354 = vmul.f32 %v329, 1.442695
        %v355 = vpow.pop %v354
        %v356 = vmul.f32 %v330, 1.442695
        %v357 = vpow.pop %v356
        %v358 = vmul.f32 %v331, 1.442695
        %v359 = vpow.pop %v358
        %v360 = vmul.f32 %v332, 1.442695
        %v361 = vpow.pop %v360
        %v362 = vmul.f32 %v333, 1.442695
        %v363 = vpow.pop %v362
        %v364 = vmul.f32 %v334, 1.442695
        %v365 = vpow.pop %v364
        %v366 = vmul.f32 %v335, 1.442695
        %v367 = vpow.pop %v366
        %v368 = vadd.f32 %v337, %v339
        %v369 = vadd.f32 %v368, %v341
        %v370 = vadd.f32 %v369, %v343
        %v371 = vadd.f32 %v370, %v345
        %v372 = vadd.f32 %v371, %v347
        %v373 = vadd.f32 %v372, %v349
        %v374 = vadd.f32 %v373, %v351
        %v375 = vadd.f32 %v374, %v353
        %v376 = vadd.f32 %v375, %v355
        %v377 = vadd.f32 %v376, %v357
        %v378 = vadd.f32 %v377, %v359
        %v379 = vadd.f32 %v378, %v361
        %v380 = vadd.f32 %v379, %v363
        %v381 = vadd.f32 %v380, %v365
        %v382 = vadd.f32 %v381, %v367
        %v383 = vrot.slane %v382, 4
        %v384 = vadd.f32 %v382, %v383
        %v385 = vrot.slane %v384, 2
        %v386 = vadd.f32 %v384, %v385
        %v387 = vrot.slane %v386, 1
        %v388 = vadd.f32 %v386, %v387
        %v389 = vrcp.pop %v388
        %v390 = vmul.f32 %v388, %v389
        %v391 = vsub.f32 2.0, %v390
        %v392 = vmul.f32 %v389, %v391
        %v393 = vmul.f32 %v337, %v392
        %v394 = vmul.f32 %v339, %v392
        %v395 = vmul.f32 %v341, %v392
        %v396 = vmul.f32 %v343, %v392
        %v397 = vmul.f32 %v345, %v392
        %v398 = vmul.f32 %v347, %v392
        %v399 = vmul.f32 %v349, %v392
        %v400 = vmul.f32 %v351, %v392
        %v401 = vmul.f32 %v353, %v392
        %v402 = vmul.f32 %v355, %v392
        %v403 = vmul.f32 %v357, %v392
        %v404 = vmul.f32 %v359, %v392
        %v405 = vmul.f32 %v361, %v392
        %v406 = vmul.f32 %v363, %v392
        %v407 = vmul.f32 %v365, %v392
        %v408 = vmul.f32 %v367, %v392
        %409 = vmatpush.msra.mxu0 %v408
        %410 = vmatpush.msra.mxu0 %v407
        %411 = vmatpush.msra.mxu0 %v406
        %412 = vmatpush.msra.mxu0 %v405
        %413 = vmatpush.msra.mxu0 %v404
        %414 = vmatpush.msra.mxu0 %v403
        %415 = vmatpush.msra.mxu0 %v402
        %416 = vmatpush.msra.mxu0 %v401
        %417 = vmatpush.msra.mxu0 %v400
        %418 = vmatpush.msra.mxu0 %v399
        %419 = vmatpush.msra.mxu0 %v398
        %420 = vmatpush.msra.mxu0 %v397
        %421 = vmatpush.msra.mxu0 %v396
        %422 = vmatpush.msra.mxu0 %v395
        %423 = vmatpush.msra.mxu0 %v394
        %424 = vmatpush.msra.mxu0 %v393
        %425 = vmatmul.f32.gmra.mxu0 %v141
        %v426 = vpop.f32.mrf.mxu0
        %v427 = vadd.f32 0.0, %v426
        %428 = vmatmul.f32.gmra.mxu0 %v142
        %v429 = vpop.f32.mrf.mxu0
        %v430 = vadd.f32 0.0, %v429
        %431 = vmatmul.f32.gmra.mxu0 %v143
        %v432 = vpop.f32.mrf.mxu0
        %v433 = vadd.f32 0.0, %v432
        %434 = vmatmul.f32.gmra.mxu0 %v144
        %v435 = vpop.f32.mrf.mxu0
        %v436 = vadd.f32 0.0, %v435
        %437 = vdwg.mxu0
        %438 = vst [vmem:[%s136] sm:$0xff] %v427
        %439 = vst [vmem:[%s136 + $0x8] sm:$0xff] %v430
        %440 = vst [vmem:[%s136 + $0x10] sm:$0xff] %v433
        %441 = vst [vmem:[%s136 + $0x18] sm:$0xff] %v436
        %v442 = vld [vmem:[%s117 + $0x80] sm:$0xff]
        %v443 = vld [vmem:[%s117 + $0x88] sm:$0xff]
        %v444 = vld [vmem:[%s117 + $0x90] sm:$0xff]
        %v445 = vld [vmem:[%s117 + $0x98] sm:$0xff]
        %v446 = vld [vmem:[%s117 + $0xa0] sm:$0xff]
        %v447 = vld [vmem:[%s117 + $0xa8] sm:$0xff]
        %v448 = vld [vmem:[%s117 + $0xb0] sm:$0xff]
        %v449 = vld [vmem:[%s117 + $0xb8] sm:$0xff]
        %v450 = vld [vmem:[%s117 + $0x60] sm:$0xff]
        %v451 = vld [vmem:[%s117 + $0x68] sm:$0xff]
        %v452 = vld [vmem:[%s117 + $0x70] sm:$0xff]
        %v453 = vld [vmem:[%s117 + $0x78] sm:$0xff]
        %v454 = vmul.f32 %v450, 0.17677669
        %v455 = vmul.f32 %v451, 0.17677669
        %v456 = vmul.f32 %v452, 0.17677669
        %v457 = vmul.f32 %v453, 0.17677669
        %458 = vxpose.xlu0.b32.start [1/16] %v442, 128
        %459 = vxpose.xlu0.b32.cont [2/16] %v443, 128
        %460 = vxpose.xlu0.b32.cont [3/16] %v444, 128
        %461 = vxpose.xlu0.b32.cont [4/16] %v445, 128
        %462 = vxpose.xlu0.b32.cont [5/16] 0.0, 128
        %463 = vxpose.xlu0.b32.cont [6/16] 0.0, 128
        %464 = vxpose.xlu0.b32.cont [7/16] 0.0, 128
        %465 = vxpose.xlu0.b32.cont [8/16] 0.0, 128
        %466 = vxpose.xlu0.b32.cont [9/16] 0.0, 128
        %467 = vxpose.xlu0.b32.cont [10/16] 0.0, 128
        %468 = vxpose.xlu0.b32.cont [11/16] 0.0, 128
        %469 = vxpose.xlu0.b32.cont [12/16] 0.0, 128
        %470 = vxpose.xlu0.b32.cont [13/16] 0.0, 128
        %471 = vxpose.xlu0.b32.cont [14/16] 0.0, 128
        %472 = vxpose.xlu0.b32.cont [15/16] 0.0, 128
        %473 = vxpose.xlu0.b32.end [16/16] 0.0, 128
        %v474 = vpop.trf.xlu0
        %v475 = vpop.trf.xlu0
        %v476 = vpop.trf.xlu0
        %v477 = vpop.trf.xlu0
        %v478 = vpop.trf.xlu0
        %v479 = vpop.trf.xlu0
        %v480 = vpop.trf.xlu0
        %v481 = vpop.trf.xlu0
        %v482 = vpop.trf.xlu0
        %v483 = vpop.trf.xlu0
        %v484 = vpop.trf.xlu0
        %v485 = vpop.trf.xlu0
        %v486 = vpop.trf.xlu0
        %v487 = vpop.trf.xlu0
        %v488 = vpop.trf.xlu0
        %v489 = vpop.trf.xlu0
        %v491 = vsel %vm185, %v474, 0
        %v494 = vsel %vm185, %v475, 0
        %v497 = vsel %vm185, %v476, 0
        %v500 = vsel %vm185, %v477, 0
        %v503 = vsel %vm185, %v478, 0
        %v506 = vsel %vm185, %v479, 0
        %v509 = vsel %vm185, %v480, 0
        %v512 = vsel %vm185, %v481, 0
        %v515 = vsel %vm185, %v482, 0
        %v518 = vsel %vm185, %v483, 0
        %v521 = vsel %vm185, %v484, 0
        %v524 = vsel %vm185, %v485, 0
        %v527 = vsel %vm185, %v486, 0
        %v530 = vsel %vm185, %v487, 0
        %v533 = vsel %vm185, %v488, 0
        %v536 = vsel %vm185, %v489, 0
        %538 = vmatpush.msra.mxu0 0.0
        %539 = vmatpush.msra.mxu0 0.0
        %540 = vmatpush.msra.mxu0 0.0
        %541 = vmatpush.msra.mxu0 0.0
        %542 = vmatpush.msra.mxu0 0.0
        %543 = vmatpush.msra.mxu0 0.0
        %544 = vmatpush.msra.mxu0 0.0
        %545 = vmatpush.msra.mxu0 0.0
        %546 = vmatpush.msra.mxu0 0.0
        %547 = vmatpush.msra.mxu0 0.0
        %548 = vmatpush.msra.mxu0 0.0
        %549 = vmatpush.msra.mxu0 0.0
        %550 = vmatpush.msra.mxu0 %v457
        %551 = vmatpush.msra.mxu0 %v456
        %552 = vmatpush.msra.mxu0 %v455
        %553 = vmatpush.msra.mxu0 %v454
        %554 = vmatmul.f32.gmra.mxu0 %v491
        %v555 = vpop.f32.mrf.mxu0
        %v556 = vadd.f32 0.0, %v555
        %557 = vmatmul.f32.gmra.mxu0 %v494
        %v558 = vpop.f32.mrf.mxu0
        %v559 = vadd.f32 0.0, %v558
        %560 = vmatmul.f32.gmra.mxu0 %v497
        %v561 = vpop.f32.mrf.mxu0
        %v562 = vadd.f32 0.0, %v561
        %563 = vmatmul.f32.gmra.mxu0 %v500
        %v564 = vpop.f32.mrf.mxu0
        %v565 = vadd.f32 0.0, %v564
        %566 = vmatmul.f32.gmra.mxu0 %v503
        %v567 = vpop.f32.mrf.mxu0
        %v568 = vadd.f32 0.0, %v567
        %569 = vmatmul.f32.gmra.mxu0 %v506
        %v570 = vpop.f32.mrf.mxu0
        %v571 = vadd.f32 0.0, %v570
        %572 = vmatmul.f32.gmra.mxu0 %v509
        %v573 = vpop.f32.mrf.mxu0
        %v574 = vadd.f32 0.0, %v573
        %575 = vmatmul.f32.gmra.mxu0 %v512
        %v576 = vpop.f32.mrf.mxu0
        %v577 = vadd.f32 0.0, %v576
        %578 = vmatmul.f32.gmra.mxu0 %v515
        %v579 = vpop.f32.mrf.mxu0
        %v580 = vadd.f32 0.0, %v579
        %581 = vmatmul.f32.gmra.mxu0 %v518
        %v582 = vpop.f32.mrf.mxu0
        %v583 = vadd.f32 0.0, %v582
        %584 = vmatmul.f32.gmra.mxu0 %v521
        %v585 = vpop.f32.mrf.mxu0
        %v586 = vadd.f32 0.0, %v585
        %587 = vmatmul.f32.gmra.mxu0 %v524
        %v588 = vpop.f32.mrf.mxu0
        %v589 = vadd.f32 0.0, %v588
        %590 = vmatmul.f32.gmra.mxu0 %v527
        %v591 = vpop.f32.mrf.mxu0
        %v592 = vadd.f32 0.0, %v591
        %593 = vmatmul.f32.gmra.mxu0 %v530
        %v594 = vpop.f32.mrf.mxu0
        %v595 = vadd.f32 0.0, %v594
        %596 = vmatmul.f32.gmra.mxu0 %v533
        %v597 = vpop.f32.mrf.mxu0
        %v598 = vadd.f32 0.0, %v597
        %599 = vmatmul.f32.gmra.mxu0 %v536
        %v600 = vpop.f32.mrf.mxu0
        %v601 = vadd.f32 0.0, %v600
        %602 = vdwg.mxu0
        %v603 = vmax.f32 %v556, %v568
        %v604 = vmax.f32 %v559, %v571
        %v605 = vmax.f32 %v562, %v574
        %v606 = vmax.f32 %v565, %v577
        %v607 = vmax.f32 %v603, %v580
        %v608 = vmax.f32 %v604, %v583
        %v609 = vmax.f32 %v605, %v586
        %v610 = vmax.f32 %v606, %v589
        %v611 = vmax.f32 %v607, %v592
        %v612 = vmax.f32 %v608, %v595
        %v613 = vmax.f32 %v609, %v598
        %v614 = vmax.f32 %v610, %v601
        %v615 = vmax.f32 %v611, %v612
        %v616 = vmax.f32 %v613, %v614
        %v617 = vmax.f32 %v615, %v616
        %v618 = vrot.slane %v617, 4
        %v619 = vmax.f32 %v617, %v618
        %v620 = vrot.slane %v619, 2
        %v621 = vmax.f32 %v619, %v620
        %v622 = vrot.slane %v621, 1
        %v623 = vmax.f32 %v621, %v622
        %v624 = vsub.f32 %v556, %v623
        %v625 = vsub.f32 %v559, %v623
        %v626 = vsub.f32 %v562, %v623
        %v627 = vsub.f32 %v565, %v623
        %v628 = vsub.f32 %v568, %v623
        %v629 = vsub.f32 %v571, %v623
        %v630 = vsub.f32 %v574, %v623
        %v631 = vsub.f32 %v577, %v623
        %v632 = vsub.f32 %v580, %v623
        %v633 = vsub.f32 %v583, %v623
        %v634 = vsub.f32 %v586, %v623
        %v635 = vsub.f32 %v589, %v623
        %v636 = vsub.f32 %v592, %v623
        %v637 = vsub.f32 %v595, %v623
        %v638 = vsub.f32 %v598, %v623
        %v639 = vsub.f32 %v601, %v623
        %v640 = vmul.f32 %v624, 1.442695
        %v641 = vpow.pop %v640
        %v642 = vmul.f32 %v625, 1.442695
        %v643 = vpow.pop %v642
        %v644 = vmul.f32 %v626, 1.442695
        %v645 = vpow.pop %v644
        %v646 = vmul.f32 %v627, 1.442695
        %v647 = vpow.pop %v646
        %v648 = vmul.f32 %v628, 1.442695
        %v649 = vpow.pop %v648
        %v650 = vmul.f32 %v629, 1.442695
        %v651 = vpow.pop %v650
        %v652 = vmul.f32 %v630, 1.442695
        %v653 = vpow.pop %v652
        %v654 = vmul.f32 %v631, 1.442695
        %v655 = vpow.pop %v654
        %v656 = vmul.f32 %v632, 1.442695
        %v657 = vpow.pop %v656
        %v658 = vmul.f32 %v633, 1.442695
        %v659 = vpow.pop %v658
        %v660 = vmul.f32 %v634, 1.442695
        %v661 = vpow.pop %v660
        %v662 = vmul.f32 %v635, 1.442695
        %v663 = vpow.pop %v662
        %v664 = vmul.f32 %v636, 1.442695
        %v665 = vpow.pop %v664
        %v666 = vmul.f32 %v637, 1.442695
        %v667 = vpow.pop %v666
        %v668 = vmul.f32 %v638, 1.442695
        %v669 = vpow.pop %v668
        %v670 = vmul.f32 %v639, 1.442695
        %v671 = vpow.pop %v670
        %v672 = vadd.f32 %v641, %v643
        %v673 = vadd.f32 %v672, %v645
        %v674 = vadd.f32 %v673, %v647
        %v675 = vadd.f32 %v674, %v649
        %v676 = vadd.f32 %v675, %v651
        %v677 = vadd.f32 %v676, %v653
        %v678 = vadd.f32 %v677, %v655
        %v679 = vadd.f32 %v678, %v657
        %v680 = vadd.f32 %v679, %v659
        %v681 = vadd.f32 %v680, %v661
        %v682 = vadd.f32 %v681, %v663
        %v683 = vadd.f32 %v682, %v665
        %v684 = vadd.f32 %v683, %v667
        %v685 = vadd.f32 %v684, %v669
        %v686 = vadd.f32 %v685, %v671
        %v687 = vrot.slane %v686, 4
        %v688 = vadd.f32 %v686, %v687
        %v689 = vrot.slane %v688, 2
        %v690 = vadd.f32 %v688, %v689
        %v691 = vrot.slane %v690, 1
        %v692 = vadd.f32 %v690, %v691
        %v693 = vrcp.pop %v692
        %v694 = vmul.f32 %v692, %v693
        %v695 = vsub.f32 2.0, %v694
        %v696 = vmul.f32 %v693, %v695
        %v697 = vmul.f32 %v641, %v696
        %v698 = vmul.f32 %v643, %v696
        %v699 = vmul.f32 %v645, %v696
        %v700 = vmul.f32 %v647, %v696
        %v701 = vmul.f32 %v649, %v696
        %v702 = vmul.f32 %v651, %v696
        %v703 = vmul.f32 %v653, %v696
        %v704 = vmul.f32 %v655, %v696
        %v705 = vmul.f32 %v657, %v696
        %v706 = vmul.f32 %v659, %v696
        %v707 = vmul.f32 %v661, %v696
        %v708 = vmul.f32 %v663, %v696
        %v709 = vmul.f32 %v665, %v696
        %v710 = vmul.f32 %v667, %v696
        %v711 = vmul.f32 %v669, %v696
        %v712 = vmul.f32 %v671, %v696
        %713 = vmatpush.msra.mxu0 %v712
        %714 = vmatpush.msra.mxu0 %v711
        %715 = vmatpush.msra.mxu0 %v710
        %716 = vmatpush.msra.mxu0 %v709
        %717 = vmatpush.msra.mxu0 %v708
        %718 = vmatpush.msra.mxu0 %v707
        %719 = vmatpush.msra.mxu0 %v706
        %720 = vmatpush.msra.mxu0 %v705
        %721 = vmatpush.msra.mxu0 %v704
        %722 = vmatpush.msra.mxu0 %v703
        %723 = vmatpush.msra.mxu0 %v702
        %724 = vmatpush.msra.mxu0 %v701
        %725 = vmatpush.msra.mxu0 %v700
        %726 = vmatpush.msra.mxu0 %v699
        %727 = vmatpush.msra.mxu0 %v698
        %728 = vmatpush.msra.mxu0 %v697
        %729 = vmatmul.f32.gmra.mxu0 %v446
        %v730 = vpop.f32.mrf.mxu0
        %v731 = vadd.f32 0.0, %v730
        %732 = vmatmul.f32.gmra.mxu0 %v447
        %v733 = vpop.f32.mrf.mxu0
        %v734 = vadd.f32 0.0, %v733
        %735 = vmatmul.f32.gmra.mxu0 %v448
        %v736 = vpop.f32.mrf.mxu0
        %v737 = vadd.f32 0.0, %v736
        %738 = vmatmul.f32.gmra.mxu0 %v449
        %v739 = vpop.f32.mrf.mxu0
        %v740 = vadd.f32 0.0, %v739
        %741 = vdwg.mxu0
        %742 = vst [vmem:[%s136 + $0x20] sm:$0xff] %v731
        %743 = vst [vmem:[%s136 + $0x28] sm:$0xff] %v734
        %744 = vst [vmem:[%s136 + $0x30] sm:$0xff] %v737
        %745 = vst [vmem:[%s136 + $0x38] sm:$0xff] %v740
        %v746 = vld [vmem:[%s117 + $0xe0] sm:$0xff]
        %v747 = vld [vmem:[%s117 + $0xe8] sm:$0xff]
        %v748 = vld [vmem:[%s117 + $0xf0] sm:$0xff]
        %v749 = vld [vmem:[%s117 + $0xf8] sm:$0xff]
        %v750 = vld [vmem:[%s117 + $0x100] sm:$0xff]
        %v751 = vld [vmem:[%s117 + $0x108] sm:$0xff]
        %v752 = vld [vmem:[%s117 + $0x110] sm:$0xff]
        %v753 = vld [vmem:[%s117 + $0x118] sm:$0xff]
        %v754 = vld [vmem:[%s117 + $0xc0] sm:$0xff]
        %v755 = vld [vmem:[%s117 + $0xc8] sm:$0xff]
        %v756 = vld [vmem:[%s117 + $0xd0] sm:$0xff]
        %v757 = vld [vmem:[%s117 + $0xd8] sm:$0xff]
        %v758 = vmul.f32 %v754, 0.17677669
        %v759 = vmul.f32 %v755, 0.17677669
        %v760 = vmul.f32 %v756, 0.17677669
        %v761 = vmul.f32 %v757, 0.17677669
        %762 = vxpose.xlu0.b32.start [1/16] %v746, 128
        %763 = vxpose.xlu0.b32.cont [2/16] %v747, 128
        %764 = vxpose.xlu0.b32.cont [3/16] %v748, 128
        %765 = vxpose.xlu0.b32.cont [4/16] %v749, 128
        %766 = vxpose.xlu0.b32.cont [5/16] 0.0, 128
        %767 = vxpose.xlu0.b32.cont [6/16] 0.0, 128
        %768 = vxpose.xlu0.b32.cont [7/16] 0.0, 128
        %769 = vxpose.xlu0.b32.cont [8/16] 0.0, 128
        %770 = vxpose.xlu0.b32.cont [9/16] 0.0, 128
        %771 = vxpose.xlu0.b32.cont [10/16] 0.0, 128
        %772 = vxpose.xlu0.b32.cont [11/16] 0.0, 128
        %773 = vxpose.xlu0.b32.cont [12/16] 0.0, 128
        %774 = vxpose.xlu0.b32.cont [13/16] 0.0, 128
        %775 = vxpose.xlu0.b32.cont [14/16] 0.0, 128
        %776 = vxpose.xlu0.b32.cont [15/16] 0.0, 128
        %777 = vxpose.xlu0.b32.end [16/16] 0.0, 128
        %v778 = vpop.trf.xlu0
        %v779 = vpop.trf.xlu0
        %v780 = vpop.trf.xlu0
        %v781 = vpop.trf.xlu0
        %v782 = vpop.trf.xlu0
        %v783 = vpop.trf.xlu0
        %v784 = vpop.trf.xlu0
        %v785 = vpop.trf.xlu0
        %v786 = vpop.trf.xlu0
        %v787 = vpop.trf.xlu0
        %v788 = vpop.trf.xlu0
        %v789 = vpop.trf.xlu0
        %v790 = vpop.trf.xlu0
        %v791 = vpop.trf.xlu0
        %v792 = vpop.trf.xlu0
        %v793 = vpop.trf.xlu0
        %v795 = vsel %vm185, %v778, 0
        %v798 = vsel %vm185, %v779, 0
        %v801 = vsel %vm185, %v780, 0
        %v804 = vsel %vm185, %v781, 0
        %v807 = vsel %vm185, %v782, 0
        %v810 = vsel %vm185, %v783, 0
        %v813 = vsel %vm185, %v784, 0
        %v816 = vsel %vm185, %v785, 0
        %v819 = vsel %vm185, %v786, 0
        %v822 = vsel %vm185, %v787, 0
        %v825 = vsel %vm185, %v788, 0
        %v828 = vsel %vm185, %v789, 0
        %v831 = vsel %vm185, %v790, 0
        %v834 = vsel %vm185, %v791, 0
        %v837 = vsel %vm185, %v792, 0
        %v840 = vsel %vm185, %v793, 0
        %842 = vmatpush.msra.mxu0 0.0
        %843 = vmatpush.msra.mxu0 0.0
        %844 = vmatpush.msra.mxu0 0.0
        %845 = vmatpush.msra.mxu0 0.0
        %846 = vmatpush.msra.mxu0 0.0
        %847 = vmatpush.msra.mxu0 0.0
        %848 = vmatpush.msra.mxu0 0.0
        %849 = vmatpush.msra.mxu0 0.0
        %850 = vmatpush.msra.mxu0 0.0
        %851 = vmatpush.msra.mxu0 0.0
        %852 = vmatpush.msra.mxu0 0.0
        %853 = vmatpush.msra.mxu0 0.0
        %854 = vmatpush.msra.mxu0 %v761
        %855 = vmatpush.msra.mxu0 %v760
        %856 = vmatpush.msra.mxu0 %v759
        %857 = vmatpush.msra.mxu0 %v758
        %858 = vmatmul.f32.gmra.mxu0 %v795
        %v859 = vpop.f32.mrf.mxu0
        %v860 = vadd.f32 0.0, %v859
        %861 = vmatmul.f32.gmra.mxu0 %v798
        %v862 = vpop.f32.mrf.mxu0
        %v863 = vadd.f32 0.0, %v862
        %864 = vmatmul.f32.gmra.mxu0 %v801
        %v865 = vpop.f32.mrf.mxu0
        %v866 = vadd.f32 0.0, %v865
        %867 = vmatmul.f32.gmra.mxu0 %v804
        %v868 = vpop.f32.mrf.mxu0
        %v869 = vadd.f32 0.0, %v868
        %870 = vmatmul.f32.gmra.mxu0 %v807
        %v871 = vpop.f32.mrf.mxu0
        %v872 = vadd.f32 0.0, %v871
        %873 = vmatmul.f32.gmra.mxu0 %v810
        %v874 = vpop.f32.mrf.mxu0
        %v875 = vadd.f32 0.0, %v874
        %876 = vmatmul.f32.gmra.mxu0 %v813
        %v877 = vpop.f32.mrf.mxu0
        %v878 = vadd.f32 0.0, %v877
        %879 = vmatmul.f32.gmra.mxu0 %v816
        %v880 = vpop.f32.mrf.mxu0
        %v881 = vadd.f32 0.0, %v880
        %882 = vmatmul.f32.gmra.mxu0 %v819
        %v883 = vpop.f32.mrf.mxu0
        %v884 = vadd.f32 0.0, %v883
        %885 = vmatmul.f32.gmra.mxu0 %v822
        %v886 = vpop.f32.mrf.mxu0
        %v887 = vadd.f32 0.0, %v886
        %888 = vmatmul.f32.gmra.mxu0 %v825
        %v889 = vpop.f32.mrf.mxu0
        %v890 = vadd.f32 0.0, %v889
        %891 = vmatmul.f32.gmra.mxu0 %v828
        %v892 = vpop.f32.mrf.mxu0
        %v893 = vadd.f32 0.0, %v892
        %894 = vmatmul.f32.gmra.mxu0 %v831
        %v895 = vpop.f32.mrf.mxu0
        %v896 = vadd.f32 0.0, %v895
        %897 = vmatmul.f32.gmra.mxu0 %v834
        %v898 = vpop.f32.mrf.mxu0
        %v899 = vadd.f32 0.0, %v898
        %900 = vmatmul.f32.gmra.mxu0 %v837
        %v901 = vpop.f32.mrf.mxu0
        %v902 = vadd.f32 0.0, %v901
        %903 = vmatmul.f32.gmra.mxu0 %v840
        %v904 = vpop.f32.mrf.mxu0
        %v905 = vadd.f32 0.0, %v904
        %906 = vdwg.mxu0
        %v907 = vmax.f32 %v860, %v872
        %v908 = vmax.f32 %v863, %v875
        %v909 = vmax.f32 %v866, %v878
        %v910 = vmax.f32 %v869, %v881
        %v911 = vmax.f32 %v907, %v884
        %v912 = vmax.f32 %v908, %v887
        %v913 = vmax.f32 %v909, %v890
        %v914 = vmax.f32 %v910, %v893
        %v915 = vmax.f32 %v911, %v896
        %v916 = vmax.f32 %v912, %v899
        %v917 = vmax.f32 %v913, %v902
        %v918 = vmax.f32 %v914, %v905
        %v919 = vmax.f32 %v915, %v916
        %v920 = vmax.f32 %v917, %v918
        %v921 = vmax.f32 %v919, %v920
        %v922 = vrot.slane %v921, 4
        %v923 = vmax.f32 %v921, %v922
        %v924 = vrot.slane %v923, 2
        %v925 = vmax.f32 %v923, %v924
        %v926 = vrot.slane %v925, 1
        %v927 = vmax.f32 %v925, %v926
        %v928 = vsub.f32 %v860, %v927
        %v929 = vsub.f32 %v863, %v927
        %v930 = vsub.f32 %v866, %v927
        %v931 = vsub.f32 %v869, %v927
        %v932 = vsub.f32 %v872, %v927
        %v933 = vsub.f32 %v875, %v927
        %v934 = vsub.f32 %v878, %v927
        %v935 = vsub.f32 %v881, %v927
        %v936 = vsub.f32 %v884, %v927
        %v937 = vsub.f32 %v887, %v927
        %v938 = vsub.f32 %v890, %v927
        %v939 = vsub.f32 %v893, %v927
        %v940 = vsub.f32 %v896, %v927
        %v941 = vsub.f32 %v899, %v927
        %v942 = vsub.f32 %v902, %v927
        %v943 = vsub.f32 %v905, %v927
        %v944 = vmul.f32 %v928, 1.442695
        %v945 = vpow.pop %v944
        %v946 = vmul.f32 %v929, 1.442695
        %v947 = vpow.pop %v946
        %v948 = vmul.f32 %v930, 1.442695
        %v949 = vpow.pop %v948
        %v950 = vmul.f32 %v931, 1.442695
        %v951 = vpow.pop %v950
        %v952 = vmul.f32 %v932, 1.442695
        %v953 = vpow.pop %v952
        %v954 = vmul.f32 %v933, 1.442695
        %v955 = vpow.pop %v954
        %v956 = vmul.f32 %v934, 1.442695
        %v957 = vpow.pop %v956
        %v958 = vmul.f32 %v935, 1.442695
        %v959 = vpow.pop %v958
        %v960 = vmul.f32 %v936, 1.442695
        %v961 = vpow.pop %v960
        %v962 = vmul.f32 %v937, 1.442695
        %v963 = vpow.pop %v962
        %v964 = vmul.f32 %v938, 1.442695
        %v965 = vpow.pop %v964
        %v966 = vmul.f32 %v939, 1.442695
        %v967 = vpow.pop %v966
        %v968 = vmul.f32 %v940, 1.442695
        %v969 = vpow.pop %v968
        %v970 = vmul.f32 %v941, 1.442695
        %v971 = vpow.pop %v970
        %v972 = vmul.f32 %v942, 1.442695
        %v973 = vpow.pop %v972
        %v974 = vmul.f32 %v943, 1.442695
        %v975 = vpow.pop %v974
        %v976 = vadd.f32 %v945, %v947
        %v977 = vadd.f32 %v976, %v949
        %v978 = vadd.f32 %v977, %v951
        %v979 = vadd.f32 %v978, %v953
        %v980 = vadd.f32 %v979, %v955
        %v981 = vadd.f32 %v980, %v957
        %v982 = vadd.f32 %v981, %v959
        %v983 = vadd.f32 %v982, %v961
        %v984 = vadd.f32 %v983, %v963
        %v985 = vadd.f32 %v984, %v965
        %v986 = vadd.f32 %v985, %v967
        %v987 = vadd.f32 %v986, %v969
        %v988 = vadd.f32 %v987, %v971
        %v989 = vadd.f32 %v988, %v973
        %v990 = vadd.f32 %v989, %v975
        %v991 = vrot.slane %v990, 4
        %v992 = vadd.f32 %v990, %v991
        %v993 = vrot.slane %v992, 2
        %v994 = vadd.f32 %v992, %v993
        %v995 = vrot.slane %v994, 1
        %v996 = vadd.f32 %v994, %v995
        %v997 = vrcp.pop %v996
        %v998 = vmul.f32 %v996, %v997
        %v999 = vsub.f32 2.0, %v998
        %v1000 = vmul.f32 %v997, %v999
        %v1001 = vmul.f32 %v945, %v1000
        %v1002 = vmul.f32 %v947, %v1000
        %v1003 = vmul.f32 %v949, %v1000
        %v1004 = vmul.f32 %v951, %v1000
        %v1005 = vmul.f32 %v953, %v1000
        %v1006 = vmul.f32 %v955, %v1000
        %v1007 = vmul.f32 %v957, %v1000
        %v1008 = vmul.f32 %v959, %v1000
        %v1009 = vmul.f32 %v961, %v1000
        %v1010 = vmul.f32 %v963, %v1000
        %v1011 = vmul.f32 %v965, %v1000
        %v1012 = vmul.f32 %v967, %v1000
        %v1013 = vmul.f32 %v969, %v1000
        %v1014 = vmul.f32 %v971, %v1000
        %v1015 = vmul.f32 %v973, %v1000
        %v1016 = vmul.f32 %v975, %v1000
        %1017 = vmatpush.msra.mxu0 %v1016
        %1018 = vmatpush.msra.mxu0 %v1015
        %1019 = vmatpush.msra.mxu0 %v1014
        %1020 = vmatpush.msra.mxu0 %v1013
        %1021 = vmatpush.msra.mxu0 %v1012
        %1022 = vmatpush.msra.mxu0 %v1011
        %1023 = vmatpush.msra.mxu0 %v1010
        %1024 = vmatpush.msra.mxu0 %v1009
        %1025 = vmatpush.msra.mxu0 %v1008
        %1026 = vmatpush.msra.mxu0 %v1007
        %1027 = vmatpush.msra.mxu0 %v1006
        %1028 = vmatpush.msra.mxu0 %v1005
        %1029 = vmatpush.msra.mxu0 %v1004
        %1030 = vmatpush.msra.mxu0 %v1003
        %1031 = vmatpush.msra.mxu0 %v1002
        %1032 = vmatpush.msra.mxu0 %v1001
        %1033 = vmatmul.f32.gmra.mxu0 %v750
        %v1034 = vpop.f32.mrf.mxu0
        %v1035 = vadd.f32 0.0, %v1034
        %1036 = vmatmul.f32.gmra.mxu0 %v751
        %v1037 = vpop.f32.mrf.mxu0
        %v1038 = vadd.f32 0.0, %v1037
        %1039 = vmatmul.f32.gmra.mxu0 %v752
        %v1040 = vpop.f32.mrf.mxu0
        %v1041 = vadd.f32 0.0, %v1040
        %1042 = vmatmul.f32.gmra.mxu0 %v753
        %v1043 = vpop.f32.mrf.mxu0
        %v1044 = vadd.f32 0.0, %v1043
        %1045 = vdwg.mxu0
        %1046 = vst [vmem:[%s136 + $0x40] sm:$0xff] %v1035
        %1047 = vst [vmem:[%s136 + $0x48] sm:$0xff] %v1038
        %1048 = vst [vmem:[%s136 + $0x50] sm:$0xff] %v1041
        %1049 = vst [vmem:[%s136 + $0x58] sm:$0xff] %v1044
        %v1050 = vld [vmem:[%s117 + $0x140] sm:$0xff]
        %v1051 = vld [vmem:[%s117 + $0x148] sm:$0xff]
        %v1052 = vld [vmem:[%s117 + $0x150] sm:$0xff]
        %v1053 = vld [vmem:[%s117 + $0x158] sm:$0xff]
        %v1054 = vld [vmem:[%s117 + $0x160] sm:$0xff]
        %v1055 = vld [vmem:[%s117 + $0x168] sm:$0xff]
        %v1056 = vld [vmem:[%s117 + $0x170] sm:$0xff]
        %v1057 = vld [vmem:[%s117 + $0x178] sm:$0xff]
        %v1058 = vld [vmem:[%s117 + $0x120] sm:$0xff]
        %v1059 = vld [vmem:[%s117 + $0x128] sm:$0xff]
        %v1060 = vld [vmem:[%s117 + $0x130] sm:$0xff]
        %v1061 = vld [vmem:[%s117 + $0x138] sm:$0xff]
        %v1062 = vmul.f32 %v1058, 0.17677669
        %v1063 = vmul.f32 %v1059, 0.17677669
        %v1064 = vmul.f32 %v1060, 0.17677669
        %v1065 = vmul.f32 %v1061, 0.17677669
        %1066 = vxpose.xlu0.b32.start [1/16] %v1050, 128
        %1067 = vxpose.xlu0.b32.cont [2/16] %v1051, 128
        %1068 = vxpose.xlu0.b32.cont [3/16] %v1052, 128
        %1069 = vxpose.xlu0.b32.cont [4/16] %v1053, 128
        %1070 = vxpose.xlu0.b32.cont [5/16] 0.0, 128
        %1071 = vxpose.xlu0.b32.cont [6/16] 0.0, 128
        %1072 = vxpose.xlu0.b32.cont [7/16] 0.0, 128
        %1073 = vxpose.xlu0.b32.cont [8/16] 0.0, 128
        %1074 = vxpose.xlu0.b32.cont [9/16] 0.0, 128
        %1075 = vxpose.xlu0.b32.cont [10/16] 0.0, 128
        %1076 = vxpose.xlu0.b32.cont [11/16] 0.0, 128
        %1077 = vxpose.xlu0.b32.cont [12/16] 0.0, 128
        %1078 = vxpose.xlu0.b32.cont [13/16] 0.0, 128
        %1079 = vxpose.xlu0.b32.cont [14/16] 0.0, 128
        %1080 = vxpose.xlu0.b32.cont [15/16] 0.0, 128
        %1081 = vxpose.xlu0.b32.end [16/16] 0.0, 128
        %v1082 = vpop.trf.xlu0
        %v1083 = vpop.trf.xlu0
        %v1084 = vpop.trf.xlu0
        %v1085 = vpop.trf.xlu0
        %v1086 = vpop.trf.xlu0
        %v1087 = vpop.trf.xlu0
        %v1088 = vpop.trf.xlu0
        %v1089 = vpop.trf.xlu0
        %v1090 = vpop.trf.xlu0
        %v1091 = vpop.trf.xlu0
        %v1092 = vpop.trf.xlu0
        %v1093 = vpop.trf.xlu0
        %v1094 = vpop.trf.xlu0
        %v1095 = vpop.trf.xlu0
        %v1096 = vpop.trf.xlu0
        %v1097 = vpop.trf.xlu0
        %v1099 = vsel %vm185, %v1082, 0
        %v1102 = vsel %vm185, %v1083, 0
        %v1105 = vsel %vm185, %v1084, 0
        %v1108 = vsel %vm185, %v1085, 0
        %v1111 = vsel %vm185, %v1086, 0
        %v1114 = vsel %vm185, %v1087, 0
        %v1117 = vsel %vm185, %v1088, 0
        %v1120 = vsel %vm185, %v1089, 0
        %v1123 = vsel %vm185, %v1090, 0
        %v1126 = vsel %vm185, %v1091, 0
        %v1129 = vsel %vm185, %v1092, 0
        %v1132 = vsel %vm185, %v1093, 0
        %v1135 = vsel %vm185, %v1094, 0
        %v1138 = vsel %vm185, %v1095, 0
        %v1141 = vsel %vm185, %v1096, 0
        %v1144 = vsel %vm185, %v1097, 0
        %1146 = vmatpush.msra.mxu0 0.0
        %1147 = vmatpush.msra.mxu0 0.0
        %1148 = vmatpush.msra.mxu0 0.0
        %1149 = vmatpush.msra.mxu0 0.0
        %1150 = vmatpush.msra.mxu0 0.0
        %1151 = vmatpush.msra.mxu0 0.0
        %1152 = vmatpush.msra.mxu0 0.0
        %1153 = vmatpush.msra.mxu0 0.0
        %1154 = vmatpush.msra.mxu0 0.0
        %1155 = vmatpush.msra.mxu0 0.0
        %1156 = vmatpush.msra.mxu0 0.0
        %1157 = vmatpush.msra.mxu0 0.0
        %1158 = vmatpush.msra.mxu0 %v1065
        %1159 = vmatpush.msra.mxu0 %v1064
        %1160 = vmatpush.msra.mxu0 %v1063
        %1161 = vmatpush.msra.mxu0 %v1062
        %1162 = vmatmul.f32.gmra.mxu0 %v1099
        %v1163 = vpop.f32.mrf.mxu0
        %v1164 = vadd.f32 0.0, %v1163
        %1165 = vmatmul.f32.gmra.mxu0 %v1102
        %v1166 = vpop.f32.mrf.mxu0
        %v1167 = vadd.f32 0.0, %v1166
        %1168 = vmatmul.f32.gmra.mxu0 %v1105
        %v1169 = vpop.f32.mrf.mxu0
        %v1170 = vadd.f32 0.0, %v1169
        %1171 = vmatmul.f32.gmra.mxu0 %v1108
        %v1172 = vpop.f32.mrf.mxu0
        %v1173 = vadd.f32 0.0, %v1172
        %1174 = vmatmul.f32.gmra.mxu0 %v1111
        %v1175 = vpop.f32.mrf.mxu0
        %v1176 = vadd.f32 0.0, %v1175
        %1177 = vmatmul.f32.gmra.mxu0 %v1114
        %v1178 = vpop.f32.mrf.mxu0
        %v1179 = vadd.f32 0.0, %v1178
        %1180 = vmatmul.f32.gmra.mxu0 %v1117
        %v1181 = vpop.f32.mrf.mxu0
        %v1182 = vadd.f32 0.0, %v1181
        %1183 = vmatmul.f32.gmra.mxu0 %v1120
        %v1184 = vpop.f32.mrf.mxu0
        %v1185 = vadd.f32 0.0, %v1184
        %1186 = vmatmul.f32.gmra.mxu0 %v1123
        %v1187 = vpop.f32.mrf.mxu0
        %v1188 = vadd.f32 0.0, %v1187
        %1189 = vmatmul.f32.gmra.mxu0 %v1126
        %v1190 = vpop.f32.mrf.mxu0
        %v1191 = vadd.f32 0.0, %v1190
        %1192 = vmatmul.f32.gmra.mxu0 %v1129
        %v1193 = vpop.f32.mrf.mxu0
        %v1194 = vadd.f32 0.0, %v1193
        %1195 = vmatmul.f32.gmra.mxu0 %v1132
        %v1196 = vpop.f32.mrf.mxu0
        %v1197 = vadd.f32 0.0, %v1196
        %1198 = vmatmul.f32.gmra.mxu0 %v1135
        %v1199 = vpop.f32.mrf.mxu0
        %v1200 = vadd.f32 0.0, %v1199
        %1201 = vmatmul.f32.gmra.mxu0 %v1138
        %v1202 = vpop.f32.mrf.mxu0
        %v1203 = vadd.f32 0.0, %v1202
        %1204 = vmatmul.f32.gmra.mxu0 %v1141
        %v1205 = vpop.f32.mrf.mxu0
        %v1206 = vadd.f32 0.0, %v1205
        %1207 = vmatmul.f32.gmra.mxu0 %v1144
        %v1208 = vpop.f32.mrf.mxu0
        %v1209 = vadd.f32 0.0, %v1208
        %1210 = vdwg.mxu0
        %v1211 = vmax.f32 %v1164, %v1176
        %v1212 = vmax.f32 %v1167, %v1179
        %v1213 = vmax.f32 %v1170, %v1182
        %v1214 = vmax.f32 %v1173, %v1185
        %v1215 = vmax.f32 %v1211, %v1188
        %v1216 = vmax.f32 %v1212, %v1191
        %v1217 = vmax.f32 %v1213, %v1194
        %v1218 = vmax.f32 %v1214, %v1197
        %v1219 = vmax.f32 %v1215, %v1200
        %v1220 = vmax.f32 %v1216, %v1203
        %v1221 = vmax.f32 %v1217, %v1206
        %v1222 = vmax.f32 %v1218, %v1209
        %v1223 = vmax.f32 %v1219, %v1220
        %v1224 = vmax.f32 %v1221, %v1222
        %v1225 = vmax.f32 %v1223, %v1224
        %v1226 = vrot.slane %v1225, 4
        %v1227 = vmax.f32 %v1225, %v1226
        %v1228 = vrot.slane %v1227, 2
        %v1229 = vmax.f32 %v1227, %v1228
        %v1230 = vrot.slane %v1229, 1
        %v1231 = vmax.f32 %v1229, %v1230
        %v1232 = vsub.f32 %v1164, %v1231
        %v1233 = vsub.f32 %v1167, %v1231
        %v1234 = vsub.f32 %v1170, %v1231
        %v1235 = vsub.f32 %v1173, %v1231
        %v1236 = vsub.f32 %v1176, %v1231
        %v1237 = vsub.f32 %v1179, %v1231
        %v1238 = vsub.f32 %v1182, %v1231
        %v1239 = vsub.f32 %v1185, %v1231
        %v1240 = vsub.f32 %v1188, %v1231
        %v1241 = vsub.f32 %v1191, %v1231
        %v1242 = vsub.f32 %v1194, %v1231
        %v1243 = vsub.f32 %v1197, %v1231
        %v1244 = vsub.f32 %v1200, %v1231
        %v1245 = vsub.f32 %v1203, %v1231
        %v1246 = vsub.f32 %v1206, %v1231
        %v1247 = vsub.f32 %v1209, %v1231
        %v1248 = vmul.f32 %v1232, 1.442695
        %v1249 = vpow.pop %v1248
        %v1250 = vmul.f32 %v1233, 1.442695
        %v1251 = vpow.pop %v1250
        %v1252 = vmul.f32 %v1234, 1.442695
        %v1253 = vpow.pop %v1252
        %v1254 = vmul.f32 %v1235, 1.442695
        %v1255 = vpow.pop %v1254
        %v1256 = vmul.f32 %v1236, 1.442695
        %v1257 = vpow.pop %v1256
        %v1258 = vmul.f32 %v1237, 1.442695
        %v1259 = vpow.pop %v1258
        %v1260 = vmul.f32 %v1238, 1.442695
        %v1261 = vpow.pop %v1260
        %v1262 = vmul.f32 %v1239, 1.442695
        %v1263 = vpow.pop %v1262
        %v1264 = vmul.f32 %v1240, 1.442695
        %v1265 = vpow.pop %v1264
        %v1266 = vmul.f32 %v1241, 1.442695
        %v1267 = vpow.pop %v1266
        %v1268 = vmul.f32 %v1242, 1.442695
        %v1269 = vpow.pop %v1268
        %v1270 = vmul.f32 %v1243, 1.442695
        %v1271 = vpow.pop %v1270
        %v1272 = vmul.f32 %v1244, 1.442695
        %v1273 = vpow.pop %v1272
        %v1274 = vmul.f32 %v1245, 1.442695
        %v1275 = vpow.pop %v1274
        %v1276 = vmul.f32 %v1246, 1.442695
        %v1277 = vpow.pop %v1276
        %v1278 = vmul.f32 %v1247, 1.442695
        %v1279 = vpow.pop %v1278
        %v1280 = vadd.f32 %v1249, %v1251
        %v1281 = vadd.f32 %v1280, %v1253
        %v1282 = vadd.f32 %v1281, %v1255
        %v1283 = vadd.f32 %v1282, %v1257
        %v1284 = vadd.f32 %v1283, %v1259
        %v1285 = vadd.f32 %v1284, %v1261
        %v1286 = vadd.f32 %v1285, %v1263
        %v1287 = vadd.f32 %v1286, %v1265
        %v1288 = vadd.f32 %v1287, %v1267
        %v1289 = vadd.f32 %v1288, %v1269
        %v1290 = vadd.f32 %v1289, %v1271
        %v1291 = vadd.f32 %v1290, %v1273
        %v1292 = vadd.f32 %v1291, %v1275
        %v1293 = vadd.f32 %v1292, %v1277
        %v1294 = vadd.f32 %v1293, %v1279
        %v1295 = vrot.slane %v1294, 4
        %v1296 = vadd.f32 %v1294, %v1295
        %v1297 = vrot.slane %v1296, 2
        %v1298 = vadd.f32 %v1296, %v1297
        %v1299 = vrot.slane %v1298, 1
        %v1300 = vadd.f32 %v1298, %v1299
        %v1301 = vrcp.pop %v1300
        %v1302 = vmul.f32 %v1300, %v1301
        %v1303 = vsub.f32 2.0, %v1302
        %v1304 = vmul.f32 %v1301, %v1303
        %v1305 = vmul.f32 %v1249, %v1304
        %v1306 = vmul.f32 %v1251, %v1304
        %v1307 = vmul.f32 %v1253, %v1304
        %v1308 = vmul.f32 %v1255, %v1304
        %v1309 = vmul.f32 %v1257, %v1304
        %v1310 = vmul.f32 %v1259, %v1304
        %v1311 = vmul.f32 %v1261, %v1304
        %v1312 = vmul.f32 %v1263, %v1304
        %v1313 = vmul.f32 %v1265, %v1304
        %v1314 = vmul.f32 %v1267, %v1304
        %v1315 = vmul.f32 %v1269, %v1304
        %v1316 = vmul.f32 %v1271, %v1304
        %v1317 = vmul.f32 %v1273, %v1304
        %v1318 = vmul.f32 %v1275, %v1304
        %v1319 = vmul.f32 %v1277, %v1304
        %v1320 = vmul.f32 %v1279, %v1304
        %1321 = vmatpush.msra.mxu0 %v1320
        %1322 = vmatpush.msra.mxu0 %v1319
        %1323 = vmatpush.msra.mxu0 %v1318
        %1324 = vmatpush.msra.mxu0 %v1317
        %1325 = vmatpush.msra.mxu0 %v1316
        %1326 = vmatpush.msra.mxu0 %v1315
        %1327 = vmatpush.msra.mxu0 %v1314
        %1328 = vmatpush.msra.mxu0 %v1313
        %1329 = vmatpush.msra.mxu0 %v1312
        %1330 = vmatpush.msra.mxu0 %v1311
        %1331 = vmatpush.msra.mxu0 %v1310
        %1332 = vmatpush.msra.mxu0 %v1309
        %1333 = vmatpush.msra.mxu0 %v1308
        %1334 = vmatpush.msra.mxu0 %v1307
        %1335 = vmatpush.msra.mxu0 %v1306
        %1336 = vmatpush.msra.mxu0 %v1305
        %1337 = vmatmul.f32.gmra.mxu0 %v1054
        %v1338 = vpop.f32.mrf.mxu0
        %v1339 = vadd.f32 0.0, %v1338
        %1340 = vmatmul.f32.gmra.mxu0 %v1055
        %v1341 = vpop.f32.mrf.mxu0
        %v1342 = vadd.f32 0.0, %v1341
        %1343 = vmatmul.f32.gmra.mxu0 %v1056
        %v1344 = vpop.f32.mrf.mxu0
        %v1345 = vadd.f32 0.0, %v1344
        %1346 = vmatmul.f32.gmra.mxu0 %v1057
        %v1347 = vpop.f32.mrf.mxu0
        %v1348 = vadd.f32 0.0, %v1347
        %1349 = vdwg.mxu0
        %1350 = vst [vmem:[%s136 + $0x60] sm:$0xff] %v1339
        %1351 = vst [vmem:[%s136 + $0x68] sm:$0xff] %v1342
        %1352 = vst [vmem:[%s136 + $0x70] sm:$0xff] %v1345
        %1353 = vst [vmem:[%s136 + $0x78] sm:$0xff] %v1348
        %s1354 = sand.u32 %s52, 1
        %s1355 = scalar_lea.sflag [#allocation4], %s1354
        %s1356 = sand.u32 %s52, 1
        %s1357 = smul.addr %s1356, 128
        %s1358 = scalar_lea.vmem [#allocation5], %s1357
        // Predicated region
        $region29: #{tpu_custom_call.1} parent=23 // pred_check
          %p1359 = pneg %p62
        $region30: #{tpu_custom_call.1} parent=23 // pred_check_branch
          %1361 = sbr.rel (%p1359) target = $region32
        $region31: #{tpu_custom_call.1} parent=23 // pred_region
          %1363 = vsyncadd %s1355, 0
          %s1364 = smul.addr %s18, 16
          %s1365 = smul.addr %s1364, 8
          %s1366 = scalar_lea.hbm %s1, %s1365
          %s1367 = sshll.u32 %s1358, 4
          %s1368 = int_to_ptr.vmem [resolvable:$true] %s1367
          %s1369 = sshll.u32 %s1366, 4
          %s1370 = int_to_ptr.hbm [resolvable:$true] %s1369
          %1375 = dma.vmem_to_hbm [thread:$0]  %s1368, 2048, %s1370, %s1355, 128, 128, 8
        $region32: #{tpu_custom_call.1} parent=23 // pred_fallthru
          _
      $region24: #{tpu_custom_call.1} parent=5 // pred_fallthru
        _
      %p1376 = scmp.le.s32.totalorder 2, %s13
      // Predicated region
      $region33: #{tpu_custom_call.1} parent=5 // pred_check
        %p1377 = pneg %p1376
      $region34: #{tpu_custom_call.1} parent=5 // pred_check_branch
        %1379 = sbr.rel (%p1377) target = $region36
      $region35: #{tpu_custom_call.1} parent=5 // pred_region
        %s1380 = ssub.s32 %s13, 2
        // Predicated region
        $region37: #{tpu_custom_call.1} parent=35 // pred_check
          %p1381 = pneg %p68
        $region38: #{tpu_custom_call.1} parent=35 // pred_check_branch
          %1383 = sbr.rel (%p1381) target = $region40
        $region39: #{tpu_custom_call.1} parent=35 // pred_region
          %s1384 = sand.u32 %s53, 1
          %s1385 = scalar_lea.sflag [#allocation4], %s1384
          %s1386 = sand.u32 %s53, 1
          %s1387 = smul.addr %s1386, 128
          %s1388 = scalar_lea.vmem [#allocation5], %s1387
          %1390 = dma.done %s1385, 2048
        $region40: #{tpu_custom_call.1} parent=35 // pred_fallthru
          _
      $region36: #{tpu_custom_call.1} parent=5 // pred_fallthru
        _
    $region6: #{tpu_custom_call.1} parent=1 // loop_footer
      %s17 = sadd.s32 1, %s13
    $region7: #{tpu_custom_call.1} parent=1 // loop_footer_branch
      %12 = sbr.rel target = $region3
    $region8: #{tpu_custom_call.1} parent=1 // loop_exit
      _
    %1391 = vsyncpa [#allocation3], 1
    %s1392 = scalar_lea.sflag [#allocation3], 1
    %1393 = vsyncpa %s1392, 1
    %1394 = vsyncpa [#allocation4], 1
    %s1395 = scalar_lea.sflag [#allocation4], 1
    %1396 = vsyncpa %s1395, 1

</llo_original>
